<compile_context>
chip_gen: v7x
topology: tpu7x:2x2x1
jax: 0.10.0
libtpu: 0.0.40
codegen_flags: <defaults>
</compile_context>

<pallas_src>
import functools

import jax
import jax.numpy as jnp
from jax.experimental import pallas as pl
from jax.experimental.pallas import tpu as pltpu

HIDDEN = 64


def _round_up(n, m):
    return ((n + m - 1) // m) * m


def policy_kernel(x_ref, w1_ref, b1_ref, w23_ref, b23_ref, out_ref):
    # fc1 + ReLU (MXU matmul, f32 accumulation)
    h = jnp.dot(x_ref[...], w1_ref[...], preferred_element_type=jnp.float32)
    h = jnp.maximum(h + b1_ref[...], 0.0)
    # Fused heads: lanes [0:A] = mu, lane A = value, rest zero-padded to 8.
    out_ref[...] = (
        jnp.dot(h, w23_ref[...], preferred_element_type=jnp.float32) + b23_ref[...]
    )


def pack_policy_params(params):
    """One-time packing of Policy parameters for the fused-head kernel.

    Call this once per parameter update (NOT per forward) so the tiny
    packing / softplus XLA ops are not re-dispatched on every step.
    """
    w1t, b1, w2t, b2, w3t, b3, sigma_param = params
    A = w2t.shape[1]
    outp = _round_up(A + 1, 8)                       # 8 f32 lanes, not 128
    w23 = jnp.zeros((HIDDEN, outp), jnp.float32)
    w23 = w23.at[:, :A].set(w2t).at[:, A:A + 1].set(w3t)
    b23 = jnp.zeros((1, outp), jnp.float32)
    b23 = b23.at[:, :A].set(b2).at[:, A:A + 1].set(b3)
    # sigma does not depend on x -> precompute softplus here.
    sigma = jax.nn.softplus(sigma_param).reshape((1,))
    return (w1t, b1, w23, b23, sigma)


@functools.partial(
    jax.jit, static_argnames=("action_space", "tb", "min_pallas_rows"))
def policy_forward(x, packed, *, action_space, tb=2048, min_pallas_rows=512):
    """x: [B, state_space] float32. Returns (mu [B,A], sigma [1], value [B,1])."""
    w1t, b1, w23, b23, sigma = packed
    B, S = x.shape
    A = action_space
    outp = w23.shape[1]

    # Small-batch fast path: pallas_call fixed overhead dominates below ~512
    # rows, plain fused XLA is faster there on all TPU generations.
    if B < min_pallas_rows:
        h = jnp.maximum(x @ w1t + b1, 0.0)
        out = h @ w23 + b23
        return out[:, :A], sigma, out[:, A:A + 1]

    # Batch tile: multiple of 8, at most ~B/4 (keeps >= 4 grid steps so the
    # "parallel" axis can shard across v7x's 2 TensorCores), capped at `tb`
    # for long DMA bursts without blowing scoped VMEM.
    TB = min(tb, max(8, _round_up(-(-B // 4), 8)))
    TB = min(TB, _round_up(B, 8))
    grid = (pl.cdiv(B, TB),)

    cost = pl.CostEstimate(
        flops=2 * B * HIDDEN * (S + outp),
        transcendentals=0,
        bytes_accessed=4 * (B * S + S * HIDDEN + HIDDEN
                            + HIDDEN * outp + outp + B * outp),
    )

    out = pl.pallas_call(
        policy_kernel,
        out_shape=jax.ShapeDtypeStruct((B, outp), jnp.float32),
        grid=grid,
        in_specs=[
            # x: tiled over the batch; ragged last block handled by Pallas.
            pl.BlockSpec((TB, S), lambda i: (i, 0),
                         memory_space=pltpu.MemorySpace.VMEM),
            # weights / biases: full blocks, VMEM-resident across grid steps
            pl.BlockSpec((S, HIDDEN), lambda i: (0, 0),
                         memory_space=pltpu.MemorySpace.VMEM),
            pl.BlockSpec((1, HIDDEN), lambda i: (0, 0),
                         memory_space=pltpu.MemorySpace.VMEM),
            pl.BlockSpec((HIDDEN, outp), lambda i: (0, 0),
                         memory_space=pltpu.MemorySpace.VMEM),
            pl.BlockSpec((1, outp), lambda i: (0, 0),
                         memory_space=pltpu.MemorySpace.VMEM),
        ],
        out_specs=pl.BlockSpec((TB, outp), lambda i: (i, 0),
                               memory_space=pltpu.MemorySpace.VMEM),
        compiler_params=pltpu.CompilerParams(
            dimension_semantics=("parallel",)),
        cost_estimate=cost,
    )(x, w1t, b1, w23, b23)

    mu = out[:, :A]
    value = out[:, A:A + 1]
    return mu, sigma, value


def init_policy_params(key, state_space, action_space, hidden=HIDDEN):
    """Matches Policy.init_weights(): N(0,1) weights, zero biases, sigma=10."""
    k1, k2, k3 = jax.random.split(key, 3)
    # torch Linear weight is [out, in]; we store its transpose [in, out].
    w1t = jax.random.normal(k1, (state_space, hidden), dtype=jnp.float32)
    b1 = jnp.zeros((1, hidden), dtype=jnp.float32)
    w2t = jax.random.normal(k2, (hidden, action_space), dtype=jnp.float32)
    b2 = jnp.zeros((1, action_space), dtype=jnp.float32)
    w3t = jax.random.normal(k3, (hidden, 1), dtype=jnp.float32)
    b3 = jnp.zeros((1, 1), dtype=jnp.float32)
    sigma_param = jnp.full((1,), 10.0, dtype=jnp.float32)
    return (w1t, b1, w2t, b2, w3t, b3, sigma_param)


if __name__ == "__main__":
    state_space = 8
    action_space = 4
    batch = 8

    key = jax.random.PRNGKey(0)
    k_params, k_x = jax.random.split(key)

    params = init_policy_params(k_params, state_space, action_space)
    packed = pack_policy_params(params)            # one-time packing
    x = jax.random.normal(k_x, (batch, state_space), dtype=jnp.float32)

    # Force the Pallas path (min_pallas_rows=0) so the kernel is exercised
    # even at this small demo batch.
    mu, sigma, value = policy_forward(
        x, packed, action_space=action_space, min_pallas_rows=0)
    jax.block_until_ready((mu, sigma, value))

    # Reference check in plain JAX (same math as the PyTorch forward).
    w1t, b1, w2t, b2, w3t, b3, sp = params
    h_ref = jnp.maximum(x @ w1t + b1, 0.0)
    mu_ref = h_ref @ w2t + b2
    v_ref = h_ref @ w3t + b3
    sigma_ref = jax.nn.softplus(sp).reshape((1,))

    assert mu.shape == (batch, action_space)
    assert value.shape == (batch, 1)
    assert sigma.shape == (1,)
    assert jnp.allclose(mu, mu_ref, atol=1e-4, rtol=1e-4)
    assert jnp.allclose(value, v_ref, atol=1e-4, rtol=1e-4)
    assert jnp.allclose(sigma, sigma_ref, atol=1e-6, rtol=1e-6)

    # TODO(synk): Normal(mu, sigma) distribution object (sampling/log_prob) is a
    # host-side construct; the kernel returns its parameters (mu, sigma).
    print("KERNEL_OK")
</pallas_src>

<mosaic_0001>
module attributes {stable_mosaic.version = 11 : i64} {
  func.func @policy_kernel(%arg0: i32, %arg1: memref<8x8xf32, #tpu.memory_space<vmem>>, %arg2: memref<8x64xf32, #tpu.memory_space<vmem>>, %arg3: memref<1x64xf32, #tpu.memory_space<vmem>>, %arg4: memref<64x8xf32, #tpu.memory_space<vmem>>, %arg5: memref<1x8xf32, #tpu.memory_space<vmem>>, %arg6: memref<8x8xf32, #tpu.memory_space<vmem>>) attributes {dimension_semantics = [#tpu.dimension_semantics<parallel>], iteration_bounds = array<i64: 1>, scalar_prefetch = 0 : i64, scratch_operands = 0 : i64, tpu.core_type = #tpu.core_type<tc>, window_params = [{transform_indices = @transform_0, window_bounds = array<i64: 8, 8>}, {pipeline_mode = #tpu.pipeline_mode<synchronous>, transform_indices = @transform_1, window_bounds = array<i64: 8, 64>}, {pipeline_mode = #tpu.pipeline_mode<synchronous>, transform_indices = @transform_2, window_bounds = array<i64: 1, 64>}, {pipeline_mode = #tpu.pipeline_mode<synchronous>, transform_indices = @transform_3, window_bounds = array<i64: 64, 8>}, {pipeline_mode = #tpu.pipeline_mode<synchronous>, transform_indices = @transform_4, window_bounds = array<i64: 1, 8>}, {transform_indices = @transform_5, window_bounds = array<i64: 8, 8>}]} {
    %c0 = arith.constant 0 : index
    %c0_0 = arith.constant 0 : index
    %0 = vector.load %arg1[%c0, %c0_0] : memref<8x8xf32, #tpu.memory_space<vmem>>, vector<8x8xf32>
    %c0_1 = arith.constant 0 : index
    %c0_2 = arith.constant 0 : index
    %1 = vector.load %arg2[%c0_1, %c0_2] : memref<8x64xf32, #tpu.memory_space<vmem>>, vector<8x64xf32>
    %cst = arith.constant dense<0.000000e+00> : vector<8x64xf32>
    %2 = tpu.matmul %0, %1, %cst {dimension_numbers = #tpu.dot_dimension_numbers<[1], [0], [0], [1], [0, 0, 1, 1], [], []>} : vector<8x8xf32>, vector<8x64xf32>, vector<8x64xf32> -> vector<8x64xf32>
    %c0_3 = arith.constant 0 : index
    %c0_4 = arith.constant 0 : index
    %3 = vector.load %arg3[%c0_3, %c0_4] : memref<1x64xf32, #tpu.memory_space<vmem>>, vector<1x64xf32>
    %4 = vector.broadcast %3 : vector<1x64xf32> to vector<8x64xf32>
    %5 = arith.addf %2, %4 : vector<8x64xf32>
    %cst_5 = arith.constant 0.000000e+00 : f32
    %6 = vector.broadcast %cst_5 : f32 to vector<8x64xf32>
    %7 = arith.maximumf %5, %6 : vector<8x64xf32>
    %c0_6 = arith.constant 0 : index
    %c0_7 = arith.constant 0 : index
    %8 = vector.load %arg4[%c0_6, %c0_7] : memref<64x8xf32, #tpu.memory_space<vmem>>, vector<64x8xf32>
    %cst_8 = arith.constant dense<0.000000e+00> : vector<8x8xf32>
    %9 = tpu.matmul %7, %8, %cst_8 {dimension_numbers = #tpu.dot_dimension_numbers<[1], [0], [0], [1], [0, 0, 1, 1], [], []>} : vector<8x64xf32>, vector<64x8xf32>, vector<8x8xf32> -> vector<8x8xf32>
    %c0_9 = arith.constant 0 : index
    %c0_10 = arith.constant 0 : index
    %10 = vector.load %arg5[%c0_9, %c0_10] : memref<1x8xf32, #tpu.memory_space<vmem>>, vector<1x8xf32>
    %11 = vector.broadcast %10 : vector<1x8xf32> to vector<8x8xf32>
    %12 = arith.addf %9, %11 : vector<8x8xf32>
    %c0_11 = arith.constant 0 : index
    %c0_12 = arith.constant 0 : index
    %13 = vector.load %arg6[%c0_11, %c0_12] : memref<8x8xf32, #tpu.memory_space<vmem>>, vector<8x8xf32>
    tpu.vector_store %arg6[%c0_11, %c0_12], %12 {strides = array<i32>} : memref<8x8xf32, #tpu.memory_space<vmem>>, vector<8x8xf32>,
    return
  }
  func.func @transform_0(%arg0: i32) -> (i32, i32) {
    %c0_i32 = arith.constant 0 : i32
    %c0_i32_0 = arith.constant 0 : i32
    return %arg0, %c0_i32 : i32, i32
  }
  func.func @transform_1(%arg0: i32) -> (i32, i32) {
    %c0_i32 = arith.constant 0 : i32
    %c0_i32_0 = arith.constant 0 : i32
    %c0_i32_1 = arith.constant 0 : i32
    return %c0_i32, %c0_i32_0 : i32, i32
  }
  func.func @transform_2(%arg0: i32) -> (i32, i32) {
    %c0_i32 = arith.constant 0 : i32
    %c0_i32_0 = arith.constant 0 : i32
    %c0_i32_1 = arith.constant 0 : i32
    return %c0_i32, %c0_i32_0 : i32, i32
  }
  func.func @transform_3(%arg0: i32) -> (i32, i32) {
    %c0_i32 = arith.constant 0 : i32
    %c0_i32_0 = arith.constant 0 : i32
    %c0_i32_1 = arith.constant 0 : i32
    return %c0_i32, %c0_i32_0 : i32, i32
  }
  func.func @transform_4(%arg0: i32) -> (i32, i32) {
    %c0_i32 = arith.constant 0 : i32
    %c0_i32_0 = arith.constant 0 : i32
    %c0_i32_1 = arith.constant 0 : i32
    return %c0_i32, %c0_i32_0 : i32, i32
  }
  func.func @transform_5(%arg0: i32) -> (i32, i32) {
    %c0_i32 = arith.constant 0 : i32
    %c0_i32_0 = arith.constant 0 : i32
    return %arg0, %c0_i32 : i32, i32
  }
}

</mosaic_0001>

<llo_original>
// kernel: policy_forward.1
$region0: #{policy_forward.1}
  #allocation0 [shape = 'u32[]', space=smem, size = 0x4, offset = 0x4, fixed_abs, tag = 'smem constant byte address 0x4 - core index']
  #allocation1 [shape = 'u32[144,128]{1,0:T(1,128)}', space=vmem, size = 0x12000, scoped, tag = 'internal scratch']
  %s0 = inlined_call_operand.vmem [shape: f32[8,8], index: 0, kind: input, shape index: {}]
  %s1 = inlined_call_operand.vmem [shape: f32[8,64], index: 1, kind: input, shape index: {}]
  %s2 = inlined_call_operand.vmem [shape: f32[1,64], index: 2, kind: input, shape index: {}]
  %s3 = inlined_call_operand.vmem [shape: f32[64,8], index: 3, kind: input, shape index: {}]
  %s4 = inlined_call_operand.vmem [shape: f32[1,8], index: 4, kind: input, shape index: {}]
  %s5 = inlined_call_operand.vmem [shape: f32[8,8], index: 5, kind: output, shape index: {}]
  %s6 = sld [smem:[#allocation0]]
  $region30: #{policy_forward.1} parent=0
    _
  %s8 = ssub.s32 1, %s6
  %s9 = scalar_select 0, %s8, %s6
  // Predicated region
  $region2: #{policy_forward.1} parent=0 // pred_check
    _
  $region3: #{policy_forward.1} parent=0 // pred_check_branch
    %11 = sbr.rel (0) target = $region5
  $region4: #{policy_forward.1} parent=0 // pred_region
    _
  $region5: #{policy_forward.1} parent=0 // pred_fallthru
    _
  // Predicated region
  $region6: #{policy_forward.1} parent=0 // pred_check
    _
  $region7: #{policy_forward.1} parent=0 // pred_check_branch
    %13 = sbr.rel (0) target = $region9
  $region8: #{policy_forward.1} parent=0 // pred_region
    _
  $region9: #{policy_forward.1} parent=0 // pred_fallthru
    _
  // Predicated region
  $region10: #{policy_forward.1} parent=0 // pred_check
    _
  $region11: #{policy_forward.1} parent=0 // pred_check_branch
    %15 = sbr.rel (0) target = $region13
  $region12: #{policy_forward.1} parent=0 // pred_region
    _
  $region13: #{policy_forward.1} parent=0 // pred_fallthru
    _
  // Predicated region
  $region14: #{policy_forward.1} parent=0 // pred_check
    _
  $region15: #{policy_forward.1} parent=0 // pred_check_branch
    %17 = sbr.rel (0) target = $region17
  $region16: #{policy_forward.1} parent=0 // pred_region
    _
  $region17: #{policy_forward.1} parent=0 // pred_fallthru
    _
  // Predicated region
  $region18: #{policy_forward.1} parent=0 // pred_check
    _
  $region19: #{policy_forward.1} parent=0 // pred_check_branch
    %19 = sbr.rel (0) target = $region21
  $region20: #{policy_forward.1} parent=0 // pred_region
    _
  $region21: #{policy_forward.1} parent=0 // pred_fallthru
    _
  %v20 = vld [vmem:[%s0] sm:$0xff]
  %v21 = vld [vmem:[%s1] sm:$0xff]
  %v22 = vld [vmem:[%s2] sm:$0x1]
  %v24 = vlaneseq
  %v25 = vshrl.u32 %v24, 7
  %v26 = vsub.s32 0, %v25
  %v27 = vrot.slane %v22, %v26
  %vm29 = vcmask 64512
  %v31 = vsel %vm29, %v20, 0
  %33 = vmatprep.subr.mxu0 0.0
  %34 = vmatpush1.msra.mxu0 %v21
  %35 = vmatprep.subr.mxu0 0.0
  %36 = vmatpush1.msra.mxu0 0.0
  %37 = vmatprep.subr.mxu0 0.0
  %38 = vmatpush1.msra.mxu0 0.0
  %39 = vmatprep.subr.mxu0 0.0
  %40 = vmatpush1.msra.mxu0 0.0
  %41 = vmatprep.subr.mxu0 0.0
  %42 = vmatpush1.msra.mxu0 0.0
  %43 = vmatprep.subr.mxu0 0.0
  %44 = vmatpush1.msra.mxu0 0.0
  %45 = vmatprep.subr.mxu0 0.0
  %46 = vmatpush1.msra.mxu0 0.0
  %47 = vmatprep.subr.mxu0 0.0
  %48 = vmatpush1.msra.mxu0 0.0
  %49 = vmatprep.subr.mxu0 0.0
  %50 = vmatpush1.msra.mxu0 0.0
  %51 = vmatprep.subr.mxu0 0.0
  %52 = vmatpush1.msra.mxu0 0.0
  %53 = vmatprep.subr.mxu0 0.0
  %54 = vmatpush1.msra.mxu0 0.0
  %55 = vmatprep.subr.mxu0 0.0
  %56 = vmatpush1.msra.mxu0 0.0
  %57 = vmatprep.subr.mxu0 0.0
  %58 = vmatpush1.msra.mxu0 0.0
  %59 = vmatprep.subr.mxu0 0.0
  %60 = vmatpush1.msra.mxu0 0.0
  %61 = vmatprep.subr.mxu0 0.0
  %62 = vmatpush1.msra.mxu0 0.0
  %63 = vmatprep.subr.mxu0 0.0
  %64 = vmatpush1.msra.mxu0 0.0
  %65 = vmatprep.subr.mxu0 0.0
  %66 = vmatpush1.msra.mxu0 0.0
  %67 = vmatprep.subr.mxu0 0.0
  %68 = vmatpush1.msra.mxu0 0.0
  %69 = vmatprep.subr.mxu0 0.0
  %70 = vmatpush1.msra.mxu0 0.0
  %71 = vmatprep.subr.mxu0 0.0
  %72 = vmatpush1.msra.mxu0 0.0
  %73 = vmatprep.subr.mxu0 0.0
  %74 = vmatpush1.msra.mxu0 0.0
  %75 = vmatprep.subr.mxu0 0.0
  %76 = vmatpush1.msra.mxu0 0.0
  %77 = vmatprep.subr.mxu0 0.0
  %78 = vmatpush1.msra.mxu0 0.0
  %79 = vmatprep.subr.mxu0 0.0
  %80 = vmatpush1.msra.mxu0 0.0
  %81 = vmatprep.subr.mxu0 0.0
  %82 = vmatpush1.msra.mxu0 0.0
  %83 = vmatprep.subr.mxu0 0.0
  %84 = vmatpush1.msra.mxu0 0.0
  %85 = vmatprep.subr.mxu0 0.0
  %86 = vmatpush1.msra.mxu0 0.0
  %87 = vmatprep.subr.mxu0 0.0
  %88 = vmatpush1.msra.mxu0 0.0
  %89 = vmatprep.subr.mxu0 0.0
  %90 = vmatpush1.msra.mxu0 0.0
  %91 = vmatprep.subr.mxu0 0.0
  %92 = vmatpush1.msra.mxu0 0.0
  %93 = vmatprep.subr.mxu0 0.0
  %94 = vmatpush1.msra.mxu0 0.0
  %95 = vmatprep.subr.mxu0 0.0
  %96 = vmatpush1.msra.mxu0 0.0
  %97 = vmatprep.mubr.f32.mxu0 0.0
  %98 = vmatmul.mubr.f32.gmra.mrb[0].mxu0 %v31
  %v99 = vpop.f32.mrb[0].mxu0
  %v100 = vadd.f32 %v27, %v99
  %v101 = vpop.f32.mrb[0].mxu0
  %102 = vdwg.mxu0
  %v103 = vmax.f32 %v100, 0.0
  %v104 = vld [vmem:[%s3] sm:$0xff]
  %v105 = vld [vmem:[%s3 + $0x8] sm:$0xff]
  %v106 = vld [vmem:[%s3 + $0x10] sm:$0xff]
  %v107 = vld [vmem:[%s3 + $0x18] sm:$0xff]
  %v108 = vld [vmem:[%s3 + $0x20] sm:$0xff]
  %v109 = vld [vmem:[%s3 + $0x28] sm:$0xff]
  %v110 = vld [vmem:[%s3 + $0x30] sm:$0xff]
  %v111 = vld [vmem:[%s3 + $0x38] sm:$0xff]
  %v112 = vld [vmem:[%s4] sm:$0x1]
  %v114 = vlaneseq
  %v115 = vshrl.u32 %v114, 7
  %v116 = vsub.s32 0, %v115
  %v117 = vrot.slane %v112, %v116
  %vm119 = vcmask 523264
  %v121 = vsel %vm119, %v103, 0
  %123 = vmatprep.subr.mxu0 0.0
  %124 = vmatpush1.msra.mxu0 %v104
  %125 = vmatprep.subr.mxu0 0.0
  %126 = vmatpush1.msra.mxu0 %v105
  %127 = vmatprep.subr.mxu0 0.0
  %128 = vmatpush1.msra.mxu0 %v106
  %129 = vmatprep.subr.mxu0 0.0
  %130 = vmatpush1.msra.mxu0 %v107
  %131 = vmatprep.subr.mxu0 0.0
  %132 = vmatpush1.msra.mxu0 %v108
  %133 = vmatprep.subr.mxu0 0.0
  %134 = vmatpush1.msra.mxu0 %v109
  %135 = vmatprep.subr.mxu0 0.0
  %136 = vmatpush1.msra.mxu0 %v110
  %137 = vmatprep.subr.mxu0 0.0
  %138 = vmatpush1.msra.mxu0 %v111
  %139 = vmatprep.subr.mxu0 0.0
  %140 = vmatpush1.msra.mxu0 0.0
  %141 = vmatprep.subr.mxu0 0.0
  %142 = vmatpush1.msra.mxu0 0.0
  %143 = vmatprep.subr.mxu0 0.0
  %144 = vmatpush1.msra.mxu0 0.0
  %145 = vmatprep.subr.mxu0 0.0
  %146 = vmatpush1.msra.mxu0 0.0
  %147 = vmatprep.subr.mxu0 0.0
  %148 = vmatpush1.msra.mxu0 0.0
  %149 = vmatprep.subr.mxu0 0.0
  %150 = vmatpush1.msra.mxu0 0.0
  %151 = vmatprep.subr.mxu0 0.0
  %152 = vmatpush1.msra.mxu0 0.0
  %153 = vmatprep.subr.mxu0 0.0
  %154 = vmatpush1.msra.mxu0 0.0
  %155 = vmatprep.subr.mxu0 0.0
  %156 = vmatpush1.msra.mxu0 0.0
  %157 = vmatprep.subr.mxu0 0.0
  %158 = vmatpush1.msra.mxu0 0.0
  %159 = vmatprep.subr.mxu0 0.0
  %160 = vmatpush1.msra.mxu0 0.0
  %161 = vmatprep.subr.mxu0 0.0
  %162 = vmatpush1.msra.mxu0 0.0
  %163 = vmatprep.subr.mxu0 0.0
  %164 = vmatpush1.msra.mxu0 0.0
  %165 = vmatprep.subr.mxu0 0.0
  %166 = vmatpush1.msra.mxu0 0.0
  %167 = vmatprep.subr.mxu0 0.0
  %168 = vmatpush1.msra.mxu0 0.0
  %169 = vmatprep.subr.mxu0 0.0
  %170 = vmatpush1.msra.mxu0 0.0
  %171 = vmatprep.subr.mxu0 0.0
  %172 = vmatpush1.msra.mxu0 0.0
  %173 = vmatprep.subr.mxu0 0.0
  %174 = vmatpush1.msra.mxu0 0.0
  %175 = vmatprep.subr.mxu0 0.0
  %176 = vmatpush1.msra.mxu0 0.0
  %177 = vmatprep.subr.mxu0 0.0
  %178 = vmatpush1.msra.mxu0 0.0
  %179 = vmatprep.subr.mxu0 0.0
  %180 = vmatpush1.msra.mxu0 0.0
  %181 = vmatprep.subr.mxu0 0.0
  %182 = vmatpush1.msra.mxu0 0.0
  %183 = vmatprep.subr.mxu0 0.0
  %184 = vmatpush1.msra.mxu0 0.0
  %185 = vmatprep.subr.mxu0 0.0
  %186 = vmatpush1.msra.mxu0 0.0
  %187 = vmatprep.mubr.f32.mxu0 0.0
  %188 = vmatmul.mubr.f32.gmra.mrb[0].mxu0 %v121
  %v189 = vpop.f32.mrb[0].mxu0
  %v190 = vadd.f32 %v117, %v189
  %v191 = vpop.f32.mrb[0].mxu0
  %192 = vdwg.mxu0
  %193 = vst.msk [vmem:[%s5] sm:$0xff] %vm29, %v190
  // Predicated region
  $region22: #{policy_forward.1} parent=0 // pred_check
    _
  $region23: #{policy_forward.1} parent=0 // pred_check_branch
    %195 = sbr.rel (0) target = $region25
  $region24: #{policy_forward.1} parent=0 // pred_region
    _
  $region25: #{policy_forward.1} parent=0 // pred_fallthru
    _
  // Predicated region
  $region26: #{policy_forward.1} parent=0 // pred_check
    _
  $region27: #{policy_forward.1} parent=0 // pred_check_branch
    %197 = sbr.rel (0) target = $region29
  $region28: #{policy_forward.1} parent=0 // pred_region
    _
  $region29: #{policy_forward.1} parent=0 // pred_fallthru
    _

</llo_original>
